<compile_context>
chip_gen: v7x
topology: tpu7x:2x2x1
jax: 0.10.0
libtpu: 0.0.40
codegen_flags: <defaults>
</compile_context>

<pallas_src>
import functools

import jax
import jax.numpy as jnp
from jax.experimental import pallas as pl
from jax.experimental.pallas import tpu as pltpu

LN_EPS = 1e-5
LANE = 128          # lane width: last dims padded to multiples of this
BT_ALIGN = 16       # bf16 sublane packing: batch tiles are multiples of 16
BT_CAP = 512        # max rows per batch tile


def _round_up(x, m):
    return ((x + m - 1) // m) * m


# ------------------------------------------------------------------ kernels
def actor_resident_kernel(*refs, h_true, n_hidden):
    """All weights VMEM-resident; hidden layers statically unrolled."""
    if n_hidden > 0:
        (x_ref, wfc_ref, bfc_ref, wh_ref, bh_ref,
         wmu_ref, bmu_ref, ar_ref, out_ref) = refs
    else:
        (x_ref, wfc_ref, bfc_ref, wmu_ref, bmu_ref, ar_ref, out_ref) = refs
        wh_ref = bh_ref = None

    # first Linear + relu (bf16 MXU, f32 accumulate)
    h = jnp.dot(x_ref[...], wfc_ref[...],
                preferred_element_type=jnp.float32) + bfc_ref[...]
    h = jnp.maximum(h, 0.0)

    inv_n = jnp.float32(1.0 / h_true)         # divide by TRUE width; padded lanes are 0
    for i in range(n_hidden):                  # static unroll (n_hidden is small here)
        s1 = jnp.sum(h, axis=-1, keepdims=True)            # XLU reductions
        s2 = jnp.sum(h * h, axis=-1, keepdims=True)
        mean = s1 * inv_n
        var = jnp.maximum(s2 * inv_n - mean * mean, 0.0)    # guard cancellation
        inv_std = jax.lax.rsqrt(var + LN_EPS)               # EUP
        nh = (h - mean) * inv_std              # gamma/beta are pre-folded into Wh/bh
        hh = jnp.dot(nh.astype(jnp.bfloat16), wh_ref[i],
                     preferred_element_type=jnp.float32) + bh_ref[i]
        h = jnp.maximum(hh, 0.0)

    mu = jnp.dot(h.astype(jnp.bfloat16), wmu_ref[...],
                 preferred_element_type=jnp.float32) + bmu_ref[...]
    out_ref[...] = ar_ref[...] * jnp.tanh(mu)


def actor_streamed_kernel(x_ref, wfc_ref, bfc_ref, wh_ref, bh_ref,
                          wmu_ref, bmu_ref, ar_ref, out_ref, h_ref, *, h_true):
    """Fallback: hidden-layer weights streamed per grid step, h carried in VMEM scratch."""
    j = pl.program_id(1)
    last = pl.num_programs(1) - 1

    @pl.when(j == 0)
    def _first():
        h0 = jnp.dot(x_ref[...], wfc_ref[...],
                     preferred_element_type=jnp.float32) + bfc_ref[...]
        h_ref[...] = jnp.maximum(h0, 0.0)

    h = h_ref[...]
    inv_n = jnp.float32(1.0 / h_true)
    s1 = jnp.sum(h, axis=-1, keepdims=True)
    s2 = jnp.sum(h * h, axis=-1, keepdims=True)
    mean = s1 * inv_n
    var = jnp.maximum(s2 * inv_n - mean * mean, 0.0)
    inv_std = jax.lax.rsqrt(var + LN_EPS)
    nh = (h - mean) * inv_std                  # gamma/beta are pre-folded into Wh/bh
    hh = jnp.dot(nh.astype(jnp.bfloat16), wh_ref[0],
                 preferred_element_type=jnp.float32) + bh_ref[0]
    h_ref[...] = jnp.maximum(hh, 0.0)

    @pl.when(j == last)
    def _head():
        mu = jnp.dot(h_ref[...].astype(jnp.bfloat16), wmu_ref[...],
                     preferred_element_type=jnp.float32) + bmu_ref[...]
        out_ref[...] = ar_ref[...] * jnp.tanh(mu)


# ------------------------------------------------------------------ wrapper
def actor_forward(x, params, force_path=None):
    """force_path: None (auto) | 'resident' | 'streamed' (testing hook)."""
    wfc, bfc, wh, bh, gam, bet, wmu, bmu, ar = params
    B, in_size = x.shape
    h_size = wfc.shape[1]
    n_hidden = wh.shape[0]
    n_actions = wmu.shape[1]

    in_p = _round_up(in_size, LANE)
    h_p = _round_up(h_size, LANE)
    a_p = _round_up(n_actions, LANE)

    # ---- fold the LayerNorm affine into the hidden-layer weights / biases (f32) ----
    if n_hidden > 0:
        wh_f = jnp.swapaxes(gam, 1, 2) * wh          # scale row k of Wh[i] by gamma[i,k]
        bh_f = jnp.matmul(bet, wh) + bh              # beta[i] @ Wh[i] + bh[i]
    else:
        wh_f, bh_f = wh, bh

    def pad2(a, r, c):
        return jnp.pad(a, ((0, r - a.shape[0]), (0, c - a.shape[1])))

    def pad3(a, r, c):
        return jnp.pad(a, ((0, 0), (0, r - a.shape[1]), (0, c - a.shape[2])))

    # ---- generation-aware VMEM budget ----
    try:
        vmem_cap = int(pltpu.get_tpu_info().vmem_capacity_bytes)
    except Exception:
        vmem_cap = 64 << 20                          # conservative (v7x per-core VMEM)
    vmem_budget = max(32 << 20, min(int(vmem_cap * 0.78), vmem_cap - (12 << 20)))
    vmem_limit = max(32 << 20, min(vmem_cap - (8 << 20), vmem_budget + (8 << 20)))

    # ---- path + batch-tile selection (x2: Pallas double-buffers pipelined blocks) ----
    res_fixed = 2 * (in_p * h_p * 2 + h_p * 4
                     + n_hidden * (h_p * h_p * 2 + h_p * 4)
                     + h_p * a_p * 2 + 2 * a_p * 4)
    strm_fixed = 2 * (in_p * h_p * 2 + h_p * 4
                      + h_p * h_p * 2 + h_p * 4
                      + h_p * a_p * 2 + 2 * a_p * 4)
    per_row = 2 * in_p * 2 + 2 * a_p * 4 + 5 * h_p * 4    # x/out tiles + f32 temporaries

    if force_path is None:
        resident = res_fixed + BT_ALIGN * per_row <= vmem_budget
    else:
        resident = force_path == "resident"
    if n_hidden == 0:
        # TODO(synk): streamed fallback for nHidden == 0 with VMEM-exceeding Wfc/Wmu.
        resident = True
    assert resident or n_hidden >= 1

    fixed = res_fixed if resident else strm_fixed
    bt = min(BT_CAP, _round_up(max(B, 1), BT_ALIGN))
    while bt > BT_ALIGN and fixed + bt * per_row > vmem_budget:
        bt = max(BT_ALIGN, _round_up(bt // 2, BT_ALIGN))
    n_bt = -(-B // bt)
    bt = _round_up(-(-B // n_bt), BT_ALIGN)              # rebalance padding across tiles
    b_p = n_bt * bt

    # ---- zero-pad to lane-dense shapes (exact: LN divides by the true h_size) ----
    x_p = pad2(x, b_p, in_p).astype(jnp.bfloat16)
    wfc_p = pad2(wfc, in_p, h_p).astype(jnp.bfloat16)
    bfc_p = pad2(bfc, 1, h_p)
    wmu_p = pad2(wmu, h_p, a_p).astype(jnp.bfloat16)
    bmu_p = pad2(bmu, 1, a_p)
    ar_p = pad2(ar, 1, a_p)
    if n_hidden > 0:
        wh_p = pad3(wh_f, h_p, h_p).astype(jnp.bfloat16)
        bh_p = pad3(bh_f, 1, h_p)

    # ---- cost estimate (streamed path re-reads Wh once per batch tile) ----
    flops = 2 * B * (in_size * h_size + n_hidden * h_size * h_size + h_size * n_actions)
    transcendentals = B * (n_hidden + n_actions)
    bytes_accessed = int(
        x_p.size * 2 + b_p * a_p * 4
        + wfc_p.size * 2 + bfc_p.size * 4
        + wmu_p.size * 2 + (bmu_p.size + ar_p.size) * 4)
    if n_hidden > 0:
        bytes_accessed += int((wh_p.size * 2 + bh_p.size * 4) * (1 if resident else n_bt))
    cost = pl.CostEstimate(flops=flops, transcendentals=transcendentals,
                           bytes_accessed=bytes_accessed)

    if resident:
        in_specs = [
            pl.BlockSpec((bt, in_p), lambda i: (i, 0)),              # x    (batch-tiled)
            pl.BlockSpec((in_p, h_p), lambda i: (0, 0)),             # Wfc  (resident)
            pl.BlockSpec((1, h_p), lambda i: (0, 0)),                # bfc
        ]
        args = [x_p, wfc_p, bfc_p]
        if n_hidden > 0:
            in_specs += [
                pl.BlockSpec((n_hidden, h_p, h_p), lambda i: (0, 0, 0)),  # all Wh (folded)
                pl.BlockSpec((n_hidden, 1, h_p), lambda i: (0, 0, 0)),    # all bh (folded)
            ]
            args += [wh_p, bh_p]
        in_specs += [
            pl.BlockSpec((h_p, a_p), lambda i: (0, 0)),              # Wmu
            pl.BlockSpec((1, a_p), lambda i: (0, 0)),                # bmu
            pl.BlockSpec((1, a_p), lambda i: (0, 0)),                # actionRange
        ]
        args += [wmu_p, bmu_p, ar_p]

        out_p = pl.pallas_call(
            functools.partial(actor_resident_kernel, h_true=h_size, n_hidden=n_hidden),
            out_shape=jax.ShapeDtypeStruct((b_p, a_p), jnp.float32),
            grid_spec=pltpu.PrefetchScalarGridSpec(
                num_scalar_prefetch=0,
                grid=(n_bt,),
                in_specs=in_specs,
                out_specs=pl.BlockSpec((bt, a_p), lambda i: (i, 0)),
            ),
            compiler_params=pltpu.CompilerParams(
                dimension_semantics=("parallel",),
                vmem_limit_bytes=vmem_limit,
            ),
            cost_estimate=cost,
        )(*args)
    else:
        out_p = pl.pallas_call(
            functools.partial(actor_streamed_kernel, h_true=h_size),
            out_shape=jax.ShapeDtypeStruct((b_p, a_p), jnp.float32),
            grid_spec=pltpu.PrefetchScalarGridSpec(
                num_scalar_prefetch=0,
                grid=(n_bt, n_hidden),
                in_specs=[
                    pl.BlockSpec((bt, in_p), lambda i, j: (i, 0)),        # x  (batch-tiled)
                    pl.BlockSpec((in_p, h_p), lambda i, j: (0, 0)),       # Wfc
                    pl.BlockSpec((1, h_p), lambda i, j: (0, 0)),          # bfc
                    pl.BlockSpec((1, h_p, h_p), lambda i, j: (j, 0, 0)),  # Wh[j] (streamed)
                    pl.BlockSpec((1, 1, h_p), lambda i, j: (j, 0, 0)),    # bh[j]
                    pl.BlockSpec((h_p, a_p), lambda i, j: (0, 0)),        # Wmu
                    pl.BlockSpec((1, a_p), lambda i, j: (0, 0)),          # bmu
                    pl.BlockSpec((1, a_p), lambda i, j: (0, 0)),          # actionRange
                ],
                out_specs=pl.BlockSpec((bt, a_p), lambda i, j: (i, 0)),
                scratch_shapes=[pltpu.VMEM((bt, h_p), jnp.float32)],      # h across layers
            ),
            compiler_params=pltpu.CompilerParams(
                dimension_semantics=("parallel", "arbitrary"),
                vmem_limit_bytes=vmem_limit,
            ),
            cost_estimate=cost,
        )(x_p, wfc_p, bfc_p, wh_p, bh_p, wmu_p, bmu_p, ar_p)

    return out_p[:B, :n_actions]


# ------------------------------------------------------------------ params / reference
def init_params(key, in_size, n_hidden, h_size, n_actions, action_range):
    ks = jax.random.split(key, 6)
    scale = 0.1
    wfc = scale * jax.random.normal(ks[0], (in_size, h_size), jnp.float32)
    bfc = scale * jax.random.normal(ks[1], (1, h_size), jnp.float32)
    wh = scale * jax.random.normal(ks[2], (n_hidden, h_size, h_size), jnp.float32)
    bh = scale * jax.random.normal(ks[3], (n_hidden, 1, h_size), jnp.float32)
    gam = jnp.ones((n_hidden, 1, h_size), jnp.float32)    # LayerNorm weight init
    bet = jnp.zeros((n_hidden, 1, h_size), jnp.float32)   # LayerNorm bias init
    wmu = scale * jax.random.normal(ks[4], (h_size, n_actions), jnp.float32)
    bmu = scale * jax.random.normal(ks[5], (1, n_actions), jnp.float32)
    ar = jnp.asarray(action_range, jnp.float32).reshape(1, n_actions)
    return (wfc, bfc, wh, bh, gam, bet, wmu, bmu, ar)


def reference_forward(x, params):
    wfc, bfc, wh, bh, gam, bet, wmu, bmu, ar = params
    n_hidden = wh.shape[0]
    h = jnp.maximum(x @ wfc + bfc, 0.0)
    for i in range(n_hidden):
        mean = jnp.mean(h, axis=-1, keepdims=True)
        var = jnp.mean((h - mean) ** 2, axis=-1, keepdims=True)
        nh = (h - mean) * jax.lax.rsqrt(var + LN_EPS) * gam[i] + bet[i]
        h = jnp.maximum(nh @ wh[i] + bh[i], 0.0)
    return ar * jnp.tanh(h @ wmu + bmu)


if __name__ == "__main__":
    # small shapes consistent with the module
    B, IN_SIZE, N_HIDDEN, H_SIZE, N_ACTIONS = 2, 16, 2, 32, 4
    ACTION_RANGE = 0.5 * jnp.ones((N_ACTIONS,), jnp.float32)

    key = jax.random.PRNGKey(0)
    kx, kp, kg, kb = jax.random.split(key, 4)
    x = jax.random.normal(kx, (B, IN_SIZE), jnp.float32)
    params = init_params(kp, IN_SIZE, N_HIDDEN, H_SIZE, N_ACTIONS, ACTION_RANGE)

    # use non-trivial gamma / beta so the LayerNorm-affine folding is really exercised
    wfc, bfc, wh, bh, gam, bet, wmu, bmu, ar = params
    gam = gam + 0.1 * jax.random.normal(kg, gam.shape, jnp.float32)
    bet = bet + 0.1 * jax.random.normal(kb, bet.shape, jnp.float32)
    params = (wfc, bfc, wh, bh, gam, bet, wmu, bmu, ar)

    ref = reference_forward(x, params)

    # auto path (resident for these shapes) and the streamed fallback
    out_res = jax.block_until_ready(actor_forward(x, params))
    out_str = jax.block_until_ready(actor_forward(x, params, force_path="streamed"))

    for out in (out_res, out_str):
        assert out.shape == (B, N_ACTIONS)
        # bf16 matmul inputs with f32 accumulation -> small drift vs pure-f32 ref
        assert jnp.allclose(out, ref, atol=3e-2, rtol=3e-2), (
            f"mismatch vs JAX reference: max abs err {float(jnp.max(jnp.abs(out - ref)))}")

    print("KERNEL_OK")
</pallas_src>

<mosaic_0001>
module attributes {stable_mosaic.version = 11 : i64} {
  func.func @actor_resident_kernel(%arg0: i32, %arg1: memref<16x128xbf16, #tpu.memory_space<vmem>>, %arg2: memref<128x128xbf16, #tpu.memory_space<vmem>>, %arg3: memref<1x128xf32, #tpu.memory_space<vmem>>, %arg4: memref<2x128x128xbf16, #tpu.memory_space<vmem>>, %arg5: memref<2x1x128xf32, #tpu.memory_space<vmem>>, %arg6: memref<128x128xbf16, #tpu.memory_space<vmem>>, %arg7: memref<1x128xf32, #tpu.memory_space<vmem>>, %arg8: memref<1x128xf32, #tpu.memory_space<vmem>>, %arg9: memref<16x128xf32, #tpu.memory_space<vmem>>) attributes {dimension_semantics = [#tpu.dimension_semantics<parallel>], iteration_bounds = array<i64: 1>, scalar_prefetch = 0 : i64, scratch_operands = 0 : i64, tpu.core_type = #tpu.core_type<tc>, window_params = [{transform_indices = @transform_0, window_bounds = array<i64: 16, 128>}, {pipeline_mode = #tpu.pipeline_mode<synchronous>, transform_indices = @transform_1, window_bounds = array<i64: 128, 128>}, {pipeline_mode = #tpu.pipeline_mode<synchronous>, transform_indices = @transform_2, window_bounds = array<i64: 1, 128>}, {pipeline_mode = #tpu.pipeline_mode<synchronous>, transform_indices = @transform_3, window_bounds = array<i64: 2, 128, 128>}, {pipeline_mode = #tpu.pipeline_mode<synchronous>, transform_indices = @transform_4, window_bounds = array<i64: 2, 1, 128>}, {pipeline_mode = #tpu.pipeline_mode<synchronous>, transform_indices = @transform_5, window_bounds = array<i64: 128, 128>}, {pipeline_mode = #tpu.pipeline_mode<synchronous>, transform_indices = @transform_6, window_bounds = array<i64: 1, 128>}, {pipeline_mode = #tpu.pipeline_mode<synchronous>, transform_indices = @transform_7, window_bounds = array<i64: 1, 128>}, {transform_indices = @transform_8, window_bounds = array<i64: 16, 128>}]} {
    %c0 = arith.constant 0 : index
    %c0_0 = arith.constant 0 : index
    %0 = vector.load %arg1[%c0, %c0_0] : memref<16x128xbf16, #tpu.memory_space<vmem>>, vector<16x128xbf16>
    %c0_1 = arith.constant 0 : index
    %c0_2 = arith.constant 0 : index
    %1 = vector.load %arg2[%c0_1, %c0_2] : memref<128x128xbf16, #tpu.memory_space<vmem>>, vector<128x128xbf16>
    %cst = arith.constant dense<0.000000e+00> : vector<16x128xf32>
    %2 = tpu.matmul %0, %1, %cst {dimension_numbers = #tpu.dot_dimension_numbers<[1], [0], [0], [1], [0, 0, 1, 1], [], []>} : vector<16x128xbf16>, vector<128x128xbf16>, vector<16x128xf32> -> vector<16x128xf32>
    %c0_3 = arith.constant 0 : index
    %c0_4 = arith.constant 0 : index
    %3 = vector.load %arg3[%c0_3, %c0_4] : memref<1x128xf32, #tpu.memory_space<vmem>>, vector<1x128xf32>
    %4 = vector.broadcast %3 : vector<1x128xf32> to vector<16x128xf32>
    %5 = arith.addf %2, %4 : vector<16x128xf32>
    %cst_5 = arith.constant 0.000000e+00 : f32
    %6 = vector.broadcast %cst_5 : f32 to vector<16x128xf32>
    %7 = arith.maximumf %5, %6 : vector<16x128xf32>
    %cst_6 = arith.constant dense<0.000000e+00> : vector<16xf32>
    %8 = vector.multi_reduction <add>, %7, %cst_6 [1] : vector<16x128xf32> to vector<16xf32>
    %9 = vector.shape_cast %8 : vector<16xf32> to vector<16x1xf32>
    %10 = arith.mulf %7, %7 : vector<16x128xf32>
    %cst_7 = arith.constant dense<0.000000e+00> : vector<16xf32>
    %11 = vector.multi_reduction <add>, %10, %cst_7 [1] : vector<16x128xf32> to vector<16xf32>
    %12 = vector.shape_cast %11 : vector<16xf32> to vector<16x1xf32>
    %cst_8 = arith.constant 3.125000e-02 : f32
    %13 = vector.broadcast %cst_8 : f32 to vector<16x1xf32>
    %14 = arith.mulf %9, %13 : vector<16x1xf32>
    %cst_9 = arith.constant 3.125000e-02 : f32
    %15 = vector.broadcast %cst_9 : f32 to vector<16x1xf32>
    %16 = arith.mulf %12, %15 : vector<16x1xf32>
    %17 = arith.mulf %14, %14 : vector<16x1xf32>
    %18 = arith.subf %16, %17 : vector<16x1xf32>
    %cst_10 = arith.constant 0.000000e+00 : f32
    %19 = vector.broadcast %cst_10 : f32 to vector<16x1xf32>
    %20 = arith.maximumf %18, %19 : vector<16x1xf32>
    %cst_11 = arith.constant 9.99999974E-6 : f32
    %21 = vector.broadcast %cst_11 : f32 to vector<16x1xf32>
    %22 = arith.addf %20, %21 : vector<16x1xf32>
    %23 = math.rsqrt %22 : vector<16x1xf32>
    %24 = vector.broadcast %14 : vector<16x1xf32> to vector<16x128xf32>
    %25 = arith.subf %7, %24 : vector<16x128xf32>
    %26 = vector.broadcast %23 : vector<16x1xf32> to vector<16x128xf32>
    %27 = arith.mulf %25, %26 : vector<16x128xf32>
    %28 = arith.truncf %27 : vector<16x128xf32> to vector<16x128xbf16>
    %c0_12 = arith.constant 0 : index
    %c0_13 = arith.constant 0 : index
    %c0_14 = arith.constant 0 : index
    %29 = vector.load %arg4[%c0_12, %c0_13, %c0_14] : memref<2x128x128xbf16, #tpu.memory_space<vmem>>, vector<1x128x128xbf16>
    %30 = vector.shape_cast %29 : vector<1x128x128xbf16> to vector<128x128xbf16>
    %cst_15 = arith.constant dense<0.000000e+00> : vector<16x128xf32>
    %31 = tpu.matmul %28, %30, %cst_15 {dimension_numbers = #tpu.dot_dimension_numbers<[1], [0], [0], [1], [0, 0, 1, 1], [], []>} : vector<16x128xbf16>, vector<128x128xbf16>, vector<16x128xf32> -> vector<16x128xf32>
    %c0_16 = arith.constant 0 : index
    %c0_17 = arith.constant 0 : index
    %c0_18 = arith.constant 0 : index
    %32 = vector.load %arg5[%c0_16, %c0_17, %c0_18] : memref<2x1x128xf32, #tpu.memory_space<vmem>>, vector<1x1x128xf32>
    %33 = vector.shape_cast %32 : vector<1x1x128xf32> to vector<1x128xf32>
    %34 = vector.broadcast %33 : vector<1x128xf32> to vector<16x128xf32>
    %35 = arith.addf %31, %34 : vector<16x128xf32>
    %cst_19 = arith.constant 0.000000e+00 : f32
    %36 = vector.broadcast %cst_19 : f32 to vector<16x128xf32>
    %37 = arith.maximumf %35, %36 : vector<16x128xf32>
    %cst_20 = arith.constant dense<0.000000e+00> : vector<16xf32>
    %38 = vector.multi_reduction <add>, %37, %cst_20 [1] : vector<16x128xf32> to vector<16xf32>
    %39 = vector.shape_cast %38 : vector<16xf32> to vector<16x1xf32>
    %40 = arith.mulf %37, %37 : vector<16x128xf32>
    %cst_21 = arith.constant dense<0.000000e+00> : vector<16xf32>
    %41 = vector.multi_reduction <add>, %40, %cst_21 [1] : vector<16x128xf32> to vector<16xf32>
    %42 = vector.shape_cast %41 : vector<16xf32> to vector<16x1xf32>
    %cst_22 = arith.constant 3.125000e-02 : f32
    %43 = vector.broadcast %cst_22 : f32 to vector<16x1xf32>
    %44 = arith.mulf %39, %43 : vector<16x1xf32>
    %cst_23 = arith.constant 3.125000e-02 : f32
    %45 = vector.broadcast %cst_23 : f32 to vector<16x1xf32>
    %46 = arith.mulf %42, %45 : vector<16x1xf32>
    %47 = arith.mulf %44, %44 : vector<16x1xf32>
    %48 = arith.subf %46, %47 : vector<16x1xf32>
    %cst_24 = arith.constant 0.000000e+00 : f32
    %49 = vector.broadcast %cst_24 : f32 to vector<16x1xf32>
    %50 = arith.maximumf %48, %49 : vector<16x1xf32>
    %cst_25 = arith.constant 9.99999974E-6 : f32
    %51 = vector.broadcast %cst_25 : f32 to vector<16x1xf32>
    %52 = arith.addf %50, %51 : vector<16x1xf32>
    %53 = math.rsqrt %52 : vector<16x1xf32>
    %54 = vector.broadcast %44 : vector<16x1xf32> to vector<16x128xf32>
    %55 = arith.subf %37, %54 : vector<16x128xf32>
    %56 = vector.broadcast %53 : vector<16x1xf32> to vector<16x128xf32>
    %57 = arith.mulf %55, %56 : vector<16x128xf32>
    %58 = arith.truncf %57 : vector<16x128xf32> to vector<16x128xbf16>
    %c1 = arith.constant 1 : index
    %c0_26 = arith.constant 0 : index
    %c0_27 = arith.constant 0 : index
    %59 = vector.load %arg4[%c1, %c0_26, %c0_27] : memref<2x128x128xbf16, #tpu.memory_space<vmem>>, vector<1x128x128xbf16>
    %60 = vector.shape_cast %59 : vector<1x128x128xbf16> to vector<128x128xbf16>
    %cst_28 = arith.constant dense<0.000000e+00> : vector<16x128xf32>
    %61 = tpu.matmul %58, %60, %cst_28 {dimension_numbers = #tpu.dot_dimension_numbers<[1], [0], [0], [1], [0, 0, 1, 1], [], []>} : vector<16x128xbf16>, vector<128x128xbf16>, vector<16x128xf32> -> vector<16x128xf32>
    %c1_29 = arith.constant 1 : index
    %c0_30 = arith.constant 0 : index
    %c0_31 = arith.constant 0 : index
    %62 = vector.load %arg5[%c1_29, %c0_30, %c0_31] : memref<2x1x128xf32, #tpu.memory_space<vmem>>, vector<1x1x128xf32>
    %63 = vector.shape_cast %62 : vector<1x1x128xf32> to vector<1x128xf32>
    %64 = vector.broadcast %63 : vector<1x128xf32> to vector<16x128xf32>
    %65 = arith.addf %61, %64 : vector<16x128xf32>
    %cst_32 = arith.constant 0.000000e+00 : f32
    %66 = vector.broadcast %cst_32 : f32 to vector<16x128xf32>
    %67 = arith.maximumf %65, %66 : vector<16x128xf32>
    %68 = arith.truncf %67 : vector<16x128xf32> to vector<16x128xbf16>
    %c0_33 = arith.constant 0 : index
    %c0_34 = arith.constant 0 : index
    %69 = vector.load %arg6[%c0_33, %c0_34] : memref<128x128xbf16, #tpu.memory_space<vmem>>, vector<128x128xbf16>
    %cst_35 = arith.constant dense<0.000000e+00> : vector<16x128xf32>
    %70 = tpu.matmul %68, %69, %cst_35 {dimension_numbers = #tpu.dot_dimension_numbers<[1], [0], [0], [1], [0, 0, 1, 1], [], []>} : vector<16x128xbf16>, vector<128x128xbf16>, vector<16x128xf32> -> vector<16x128xf32>
    %c0_36 = arith.constant 0 : index
    %c0_37 = arith.constant 0 : index
    %71 = vector.load %arg7[%c0_36, %c0_37] : memref<1x128xf32, #tpu.memory_space<vmem>>, vector<1x128xf32>
    %72 = vector.broadcast %71 : vector<1x128xf32> to vector<16x128xf32>
    %73 = arith.addf %70, %72 : vector<16x128xf32>
    %c0_38 = arith.constant 0 : index
    %c0_39 = arith.constant 0 : index
    %74 = vector.load %arg8[%c0_38, %c0_39] : memref<1x128xf32, #tpu.memory_space<vmem>>, vector<1x128xf32>
    %75 = math.tanh %73 : vector<16x128xf32>
    %76 = vector.broadcast %74 : vector<1x128xf32> to vector<16x128xf32>
    %77 = arith.mulf %76, %75 : vector<16x128xf32>
    %c0_40 = arith.constant 0 : index
    %c0_41 = arith.constant 0 : index
    %78 = vector.load %arg9[%c0_40, %c0_41] : memref<16x128xf32, #tpu.memory_space<vmem>>, vector<16x128xf32>
    tpu.vector_store %arg9[%c0_40, %c0_41], %77 {strides = array<i32>} : memref<16x128xf32, #tpu.memory_space<vmem>>, vector<16x128xf32>,
    return
  }
  func.func @transform_0(%arg0: i32) -> (i32, i32) {
    %c0_i32 = arith.constant 0 : i32
    %c0_i32_0 = arith.constant 0 : i32
    return %arg0, %c0_i32 : i32, i32
  }
  func.func @transform_1(%arg0: i32) -> (i32, i32) {
    %c0_i32 = arith.constant 0 : i32
    %c0_i32_0 = arith.constant 0 : i32
    %c0_i32_1 = arith.constant 0 : i32
    return %c0_i32, %c0_i32_0 : i32, i32
  }
  func.func @transform_2(%arg0: i32) -> (i32, i32) {
    %c0_i32 = arith.constant 0 : i32
    %c0_i32_0 = arith.constant 0 : i32
    %c0_i32_1 = arith.constant 0 : i32
    return %c0_i32, %c0_i32_0 : i32, i32
  }
  func.func @transform_3(%arg0: i32) -> (i32, i32, i32) {
    %c0_i32 = arith.constant 0 : i32
    %c0_i32_0 = arith.constant 0 : i32
    %c0_i32_1 = arith.constant 0 : i32
    %c0_i32_2 = arith.constant 0 : i32
    return %c0_i32, %c0_i32_0, %c0_i32_1 : i32, i32, i32
  }
  func.func @transform_4(%arg0: i32) -> (i32, i32, i32) {
    %c0_i32 = arith.constant 0 : i32
    %c0_i32_0 = arith.constant 0 : i32
    %c0_i32_1 = arith.constant 0 : i32
    %c0_i32_2 = arith.constant 0 : i32
    return %c0_i32, %c0_i32_0, %c0_i32_1 : i32, i32, i32
  }
  func.func @transform_5(%arg0: i32) -> (i32, i32) {
    %c0_i32 = arith.constant 0 : i32
    %c0_i32_0 = arith.constant 0 : i32
    %c0_i32_1 = arith.constant 0 : i32
    return %c0_i32, %c0_i32_0 : i32, i32
  }
  func.func @transform_6(%arg0: i32) -> (i32, i32) {
    %c0_i32 = arith.constant 0 : i32
    %c0_i32_0 = arith.constant 0 : i32
    %c0_i32_1 = arith.constant 0 : i32
    return %c0_i32, %c0_i32_0 : i32, i32
  }
  func.func @transform_7(%arg0: i32) -> (i32, i32) {
    %c0_i32 = arith.constant 0 : i32
    %c0_i32_0 = arith.constant 0 : i32
    %c0_i32_1 = arith.constant 0 : i32
    return %c0_i32, %c0_i32_0 : i32, i32
  }
  func.func @transform_8(%arg0: i32) -> (i32, i32) {
    %c0_i32 = arith.constant 0 : i32
    %c0_i32_0 = arith.constant 0 : i32
    return %arg0, %c0_i32 : i32, i32
  }
}

</mosaic_0001>

<llo_original>
// kernel: tpu_custom_call.1
$region0: #{tpu_custom_call.1}
  #allocation0 [shape = 'u32[]', space=smem, size = 0x4, offset = 0x4, fixed_abs, tag = 'smem constant byte address 0x4 - core index']
  #allocation1 [shape = 'u32[144,128]{1,0:T(1,128)}', space=vmem, size = 0x12000, scoped, tag = 'internal scratch']
  %s0 = inlined_call_operand.hbm [shape: bf16[16,128], index: 0, kind: input, shape index: {}]
  %s1 = inlined_call_operand.hbm [shape: bf16[128,128], index: 1, kind: input, shape index: {}]
  %s2 = inlined_call_operand.vmem [shape: f32[1,128], index: 2, kind: input, shape index: {}]
  %s3 = inlined_call_operand.hbm [shape: bf16[2,128,128], index: 3, kind: input, shape index: {}]
  %s4 = inlined_call_operand.vmem [shape: f32[2,1,128], index: 4, kind: input, shape index: {}]
  %s5 = inlined_call_operand.hbm [shape: bf16[128,128], index: 5, kind: input, shape index: {}]
  %s6 = inlined_call_operand.vmem [shape: f32[1,128], index: 6, kind: input, shape index: {}]
  %s7 = inlined_call_operand.vmem [shape: f32[1,128], index: 7, kind: input, shape index: {}]
  %s8 = inlined_call_operand.hbm [shape: f32[16,128], index: 8, kind: output, shape index: {}]
  %s9 = sld [smem:[#allocation0]]
  $region58: #{tpu_custom_call.1} parent=0
    _
  %s11 = ssub.s32 1, %s9
  %s12 = scalar_select 0, %s11, %s9
  $region1: #{tpu_custom_call.1} parent=0
    #allocation2 [shape = 'u8[4096]{0}', space=vmem, size = 0x1000, scoped, tag = 'input window, operand 0, single buffered']
    #allocation3 [shape = 's32[1]{0}', space=sflag, size = 0x4, scoped, tag = 'scoped memory for tpu_custom_call.1']
    #allocation4 [shape = 's32[1]{0}', space=sflag, size = 0x4, scoped, tag = 'scoped memory for tpu_custom_call.1']
    #allocation5 [shape = 'u8[32768]{0}', space=vmem, size = 0x8000, scoped, tag = 'input window, operand 1, single buffered']
    #allocation6 [shape = 's32[1]{0}', space=sflag, size = 0x4, scoped, tag = 'scoped memory for tpu_custom_call.1']
    #allocation7 [shape = 'u8[65536]{0}', space=vmem, size = 0x10000, scoped, tag = 'input window, operand 3, single buffered']
    #allocation8 [shape = 'u8[32768]{0}', space=vmem, size = 0x8000, scoped, tag = 'input window, operand 5, single buffered']
    #allocation9 [shape = 's32[1]{0}', space=sflag, size = 0x4, scoped, tag = 'scoped memory for tpu_custom_call.1']
    #allocation10 [shape = 'u8[8192]{0}', space=vmem, size = 0x2000, scoped, tag = 'output window, operand 0, single buffered']
    %13 = vsyncpa [#allocation3], 0
    %14 = vsyncpa [#allocation6], 0
    %15 = vsyncpa [#allocation9], 0
    %16 = vsyncpa [#allocation4], 0
    // Predicated region
    $region2: #{tpu_custom_call.1} parent=1 // pred_check
      _
    $region3: #{tpu_custom_call.1} parent=1 // pred_check_branch
      %18 = sbr.rel (0) target = $region5
    $region4: #{tpu_custom_call.1} parent=1 // pred_region
      %s20 = ssub.s32 128, 128
      %21 = vsyncadd [#allocation3], %s20
      %s22 = sshll.u32 [#allocation2], 4
      %s23 = int_to_ptr.vmem [resolvable:$true] %s22
      %28 = dma.hbm_to_vmem [thread:$0]  %s0, 128, %s23, [#allocation3], 64, 64, 4
    $region5: #{tpu_custom_call.1} parent=1 // pred_fallthru
      _
    // Predicated region
    $region6: #{tpu_custom_call.1} parent=1 // pred_check
      _
    $region7: #{tpu_custom_call.1} parent=1 // pred_check_branch
      %30 = sbr.rel (0) target = $region9
    $region8: #{tpu_custom_call.1} parent=1 // pred_region
      %s32 = ssub.s32 1024, 1024
      %33 = vsyncadd [#allocation6], %s32
      %s34 = sshll.u32 [#allocation5], 4
      %s35 = int_to_ptr.vmem [resolvable:$true] %s34
      %40 = dma.hbm_to_vmem [thread:$0]  %s1, 1024, %s35, [#allocation6], 64, 64, 4
    $region9: #{tpu_custom_call.1} parent=1 // pred_fallthru
      _
    // Predicated region
    $region10: #{tpu_custom_call.1} parent=1 // pred_check
      _
    $region11: #{tpu_custom_call.1} parent=1 // pred_check_branch
      %42 = sbr.rel (0) target = $region13
    $region12: #{tpu_custom_call.1} parent=1 // pred_region
      _
    $region13: #{tpu_custom_call.1} parent=1 // pred_fallthru
      _
    // Predicated region
    $region14: #{tpu_custom_call.1} parent=1 // pred_check
      _
    $region15: #{tpu_custom_call.1} parent=1 // pred_check_branch
      %44 = sbr.rel (0) target = $region17
    $region16: #{tpu_custom_call.1} parent=1 // pred_region
      %s46 = ssub.s32 2048, 2048
      %47 = vsyncadd [#allocation6], %s46
      %s48 = sshll.u32 [#allocation7], 4
      %s49 = int_to_ptr.vmem [resolvable:$true] %s48
      %54 = dma.hbm_to_vmem [thread:$0]  %s3, 2048, %s49, [#allocation6], 64, 64, 4
    $region17: #{tpu_custom_call.1} parent=1 // pred_fallthru
      _
    // Predicated region
    $region18: #{tpu_custom_call.1} parent=1 // pred_check
      _
    $region19: #{tpu_custom_call.1} parent=1 // pred_check_branch
      %56 = sbr.rel (0) target = $region21
    $region20: #{tpu_custom_call.1} parent=1 // pred_region
      _
    $region21: #{tpu_custom_call.1} parent=1 // pred_fallthru
      _
    // Predicated region
    $region22: #{tpu_custom_call.1} parent=1 // pred_check
      _
    $region23: #{tpu_custom_call.1} parent=1 // pred_check_branch
      %58 = sbr.rel (0) target = $region25
    $region24: #{tpu_custom_call.1} parent=1 // pred_region
      %s60 = ssub.s32 1024, 1024
      %61 = vsyncadd [#allocation9], %s60
      %s62 = sshll.u32 [#allocation8], 4
      %s63 = int_to_ptr.vmem [resolvable:$true] %s62
      %68 = dma.hbm_to_vmem [thread:$0]  %s5, 1024, %s63, [#allocation9], 64, 64, 4
    $region25: #{tpu_custom_call.1} parent=1 // pred_fallthru
      _
    // Predicated region
    $region26: #{tpu_custom_call.1} parent=1 // pred_check
      _
    $region27: #{tpu_custom_call.1} parent=1 // pred_check_branch
      %70 = sbr.rel (0) target = $region29
    $region28: #{tpu_custom_call.1} parent=1 // pred_region
      _
    $region29: #{tpu_custom_call.1} parent=1 // pred_fallthru
      _
    // Predicated region
    $region30: #{tpu_custom_call.1} parent=1 // pred_check
      _
    $region31: #{tpu_custom_call.1} parent=1 // pred_check_branch
      %72 = sbr.rel (0) target = $region33
    $region32: #{tpu_custom_call.1} parent=1 // pred_region
      _
    $region33: #{tpu_custom_call.1} parent=1 // pred_fallthru
      _
    // Predicated region
    $region34: #{tpu_custom_call.1} parent=1 // pred_check
      _
    $region35: #{tpu_custom_call.1} parent=1 // pred_check_branch
      %74 = sbr.rel (0) target = $region37
    $region36: #{tpu_custom_call.1} parent=1 // pred_region
      %75 = dma.done [#allocation3], 128
    $region37: #{tpu_custom_call.1} parent=1 // pred_fallthru
      _
    // Predicated region
    $region38: #{tpu_custom_call.1} parent=1 // pred_check
      _
    $region39: #{tpu_custom_call.1} parent=1 // pred_check_branch
      %77 = sbr.rel (0) target = $region41
    $region40: #{tpu_custom_call.1} parent=1 // pred_region
      %78 = dma.done [#allocation6], 1024
    $region41: #{tpu_custom_call.1} parent=1 // pred_fallthru
      _
    // Predicated region
    $region42: #{tpu_custom_call.1} parent=1 // pred_check
      _
    $region43: #{tpu_custom_call.1} parent=1 // pred_check_branch
      %80 = sbr.rel (0) target = $region45
    $region44: #{tpu_custom_call.1} parent=1 // pred_region
      %81 = dma.done [#allocation6], 2048
    $region45: #{tpu_custom_call.1} parent=1 // pred_fallthru
      _
    // Predicated region
    $region46: #{tpu_custom_call.1} parent=1 // pred_check
      _
    $region47: #{tpu_custom_call.1} parent=1 // pred_check_branch
      %83 = sbr.rel (0) target = $region49
    $region48: #{tpu_custom_call.1} parent=1 // pred_region
      %84 = dma.done [#allocation9], 1024
    $region49: #{tpu_custom_call.1} parent=1 // pred_fallthru
      _
    %v86 = vld [vmem:[#allocation2] sm:$0xf]
    %v87 = vld [vmem:[#allocation2 + $0x4] sm:$0xf]
    %v88 = vld [vmem:[#allocation5] sm:$0xf]
    %v89 = vld [vmem:[#allocation5 + $0x4] sm:$0xf]
    %v90 = vld [vmem:[#allocation5 + $0x8] sm:$0xf]
    %v91 = vld [vmem:[#allocation5 + $0xc] sm:$0xf]
    %v92 = vld [vmem:[#allocation5 + $0x10] sm:$0xf]
    %v93 = vld [vmem:[#allocation5 + $0x14] sm:$0xf]
    %v94 = vld [vmem:[#allocation5 + $0x18] sm:$0xf]
    %v95 = vld [vmem:[#allocation5 + $0x1c] sm:$0xf]
    %v96 = vld [vmem:[#allocation5 + $0x20] sm:$0xf]
    %v97 = vld [vmem:[#allocation5 + $0x24] sm:$0xf]
    %v98 = vld [vmem:[#allocation5 + $0x28] sm:$0xf]
    %v99 = vld [vmem:[#allocation5 + $0x2c] sm:$0xf]
    %v100 = vld [vmem:[#allocation5 + $0x30] sm:$0xf]
    %v101 = vld [vmem:[#allocation5 + $0x34] sm:$0xf]
    %v102 = vld [vmem:[#allocation5 + $0x38] sm:$0xf]
    %v103 = vld [vmem:[#allocation5 + $0x3c] sm:$0xf]
    %v104 = vld [vmem:[%s2] sm:$0x1]
    %v106 = vlaneseq
    %v107 = vshrl.u32 %v106, 7
    %v108 = vsub.s32 0, %v107
    %v109 = vrot.slane %v104, %v108
    %v113 = vunpack.c.l.b16 %v86
    %v114 = vunpack.c.l.b16 %v87
    %v115 = vpack.c.b16 %v114, %v113
    %v133 = vunpack.c.l.b16 %v88
    %v134 = vunpack.c.l.b16 %v89
    %v135 = vunpack.c.l.b16 %v90
    %v136 = vunpack.c.l.b16 %v91
    %v137 = vunpack.c.l.b16 %v92
    %v138 = vunpack.c.l.b16 %v93
    %v139 = vunpack.c.l.b16 %v94
    %v140 = vunpack.c.l.b16 %v95
    %v141 = vunpack.c.l.b16 %v96
    %v142 = vunpack.c.l.b16 %v97
    %v143 = vunpack.c.l.b16 %v98
    %v144 = vunpack.c.l.b16 %v99
    %v145 = vunpack.c.l.b16 %v100
    %v146 = vunpack.c.l.b16 %v101
    %v147 = vunpack.c.l.b16 %v102
    %v148 = vunpack.c.l.b16 %v103
    %v149 = vpack.c.b16 %v134, %v133
    %v150 = vpack.c.b16 %v136, %v135
    %v151 = vpack.c.b16 %v138, %v137
    %v152 = vpack.c.b16 %v140, %v139
    %v153 = vpack.c.b16 %v142, %v141
    %v154 = vpack.c.b16 %v144, %v143
    %v155 = vpack.c.b16 %v146, %v145
    %v156 = vpack.c.b16 %v148, %v147
    %165 = vmatprep.subr.bf16.mxu0 0
    %166 = vmatpush1.bf16.msra.mxu0 %v149
    %167 = vmatprep.subr.bf16.mxu0 0
    %168 = vmatpush1.bf16.msra.mxu0 %v150
    %169 = vmatprep.subr.bf16.mxu0 0
    %170 = vmatpush1.bf16.msra.mxu0 %v151
    %171 = vmatprep.subr.bf16.mxu0 0
    %172 = vmatpush1.bf16.msra.mxu0 %v152
    %173 = vmatprep.subr.bf16.mxu0 0
    %174 = vmatpush1.bf16.msra.mxu0 %v153
    %175 = vmatprep.subr.bf16.mxu0 0
    %176 = vmatpush1.bf16.msra.mxu0 %v154
    %177 = vmatprep.subr.bf16.mxu0 0
    %178 = vmatpush1.bf16.msra.mxu0 %v155
    %179 = vmatprep.subr.bf16.mxu0 0
    %180 = vmatpush1.bf16.msra.mxu0 %v156
    %181 = vmatprep.subr.bf16.mxu0 0
    %182 = vmatpush1.bf16.msra.mxu0 0
    %183 = vmatprep.subr.bf16.mxu0 0
    %184 = vmatpush1.bf16.msra.mxu0 0
    %185 = vmatprep.subr.bf16.mxu0 0
    %186 = vmatpush1.bf16.msra.mxu0 0
    %187 = vmatprep.subr.bf16.mxu0 0
    %188 = vmatpush1.bf16.msra.mxu0 0
    %189 = vmatprep.subr.bf16.mxu0 0
    %190 = vmatpush1.bf16.msra.mxu0 0
    %191 = vmatprep.subr.bf16.mxu0 0
    %192 = vmatpush1.bf16.msra.mxu0 0
    %193 = vmatprep.subr.bf16.mxu0 0
    %194 = vmatpush1.bf16.msra.mxu0 0
    %195 = vmatprep.subr.bf16.mxu0 0
    %196 = vmatpush1.bf16.msra.mxu0 0
    %197 = vmatprep.mubr.bf16.mxu0 0
    %198 = vmatmul.mubr.bf16.gmra.mrb[0].mxu0 %v115
    %v199 = vpop.f32.mrb[0].mxu0
    %v200 = vadd.f32 %v109, %v199
    %v201 = vpop.f32.mrb[0].mxu0
    %v202 = vpop.f32.mrb[0].mxu0
    %v203 = vadd.f32 %v109, %v202
    %v204 = vpop.f32.mrb[0].mxu0
    %205 = vdwg.mxu0
    %v206 = vmax.f32 %v200, 0.0
    %v207 = vmax.f32 %v203, 0.0
    %208 = vadd.xlane.f32.xlu0 %v206
    %v209 = vpop.xlane.xlu0 %208
    %210 = vadd.xlane.f32.xlu0 %v207
    %v211 = vpop.xlane.xlu0 %210
    %v212 = vmul.f32 %v206, %v206
    %v213 = vmul.f32 %v207, %v207
    %214 = vadd.xlane.f32.xlu0 %v212
    %v215 = vpop.xlane.xlu0 %214
    %216 = vadd.xlane.f32.xlu0 %v213
    %v217 = vpop.xlane.xlu0 %216
    %v218 = vmul.f32 %v209, 0.03125
    %v219 = vmul.f32 %v211, 0.03125
    %v220 = vmul.f32 %v215, 0.03125
    %v221 = vmul.f32 %v217, 0.03125
    %v222 = vmul.f32 %v218, %v218
    %v223 = vmul.f32 %v219, %v219
    %v224 = vsub.f32 %v220, %v222
    %v225 = vsub.f32 %v221, %v223
    %v226 = vmax.f32 %v224, 0.0
    %v227 = vmax.f32 %v225, 0.0
    %v228 = vadd.f32 %v226, 1e-05
    %v229 = vadd.f32 %v227, 1e-05
    %v230 = vrsqrt.pop %v228
    %v231 = vrsqrt.pop %v229
    %v232 = vsub.f32 %v206, %v218
    %v233 = vsub.f32 %v207, %v219
    %v234 = vmul.f32 %v232, %v230
    %v235 = vmul.f32 %v233, %v231
    %v236 = vpack.c.bf16 %v235, %v234
    %v237 = vld [vmem:[#allocation7] sm:$0xf]
    %v238 = vld [vmem:[#allocation7 + $0x4] sm:$0xf]
    %v239 = vld [vmem:[#allocation7 + $0x8] sm:$0xf]
    %v240 = vld [vmem:[#allocation7 + $0xc] sm:$0xf]
    %v241 = vld [vmem:[#allocation7 + $0x10] sm:$0xf]
    %v242 = vld [vmem:[#allocation7 + $0x14] sm:$0xf]
    %v243 = vld [vmem:[#allocation7 + $0x18] sm:$0xf]
    %v244 = vld [vmem:[#allocation7 + $0x1c] sm:$0xf]
    %v245 = vld [vmem:[#allocation7 + $0x20] sm:$0xf]
    %v246 = vld [vmem:[#allocation7 + $0x24] sm:$0xf]
    %v247 = vld [vmem:[#allocation7 + $0x28] sm:$0xf]
    %v248 = vld [vmem:[#allocation7 + $0x2c] sm:$0xf]
    %v249 = vld [vmem:[#allocation7 + $0x30] sm:$0xf]
    %v250 = vld [vmem:[#allocation7 + $0x34] sm:$0xf]
    %v251 = vld [vmem:[#allocation7 + $0x38] sm:$0xf]
    %v252 = vld [vmem:[#allocation7 + $0x3c] sm:$0xf]
    %v253 = vld [vmem:[%s4] sm:$0x1]
    %v255 = vlaneseq
    %v256 = vshrl.u32 %v255, 7
    %v257 = vsub.s32 0, %v256
    %v258 = vrot.slane %v253, %v257
    %v276 = vunpack.c.l.b16 %v237
    %v277 = vunpack.c.l.b16 %v238
    %v278 = vunpack.c.l.b16 %v239
    %v279 = vunpack.c.l.b16 %v240
    %v280 = vunpack.c.l.b16 %v241
    %v281 = vunpack.c.l.b16 %v242
    %v282 = vunpack.c.l.b16 %v243
    %v283 = vunpack.c.l.b16 %v244
    %v284 = vunpack.c.l.b16 %v245
    %v285 = vunpack.c.l.b16 %v246
    %v286 = vunpack.c.l.b16 %v247
    %v287 = vunpack.c.l.b16 %v248
    %v288 = vunpack.c.l.b16 %v249
    %v289 = vunpack.c.l.b16 %v250
    %v290 = vunpack.c.l.b16 %v251
    %v291 = vunpack.c.l.b16 %v252
    %v292 = vpack.c.b16 %v277, %v276
    %v293 = vpack.c.b16 %v279, %v278
    %v294 = vpack.c.b16 %v281, %v280
    %v295 = vpack.c.b16 %v283, %v282
    %v296 = vpack.c.b16 %v285, %v284
    %v297 = vpack.c.b16 %v287, %v286
    %v298 = vpack.c.b16 %v289, %v288
    %v299 = vpack.c.b16 %v291, %v290
    %308 = vmatprep.subr.bf16.mxu0 0
    %309 = vmatpush1.bf16.msra.mxu0 %v292
    %310 = vmatprep.subr.bf16.mxu0 0
    %311 = vmatpush1.bf16.msra.mxu0 %v293
    %312 = vmatprep.subr.bf16.mxu0 0
    %313 = vmatpush1.bf16.msra.mxu0 %v294
    %314 = vmatprep.subr.bf16.mxu0 0
    %315 = vmatpush1.bf16.msra.mxu0 %v295
    %316 = vmatprep.subr.bf16.mxu0 0
    %317 = vmatpush1.bf16.msra.mxu0 %v296
    %318 = vmatprep.subr.bf16.mxu0 0
    %319 = vmatpush1.bf16.msra.mxu0 %v297
    %320 = vmatprep.subr.bf16.mxu0 0
    %321 = vmatpush1.bf16.msra.mxu0 %v298
    %322 = vmatprep.subr.bf16.mxu0 0
    %323 = vmatpush1.bf16.msra.mxu0 %v299
    %324 = vmatprep.subr.bf16.mxu0 0
    %325 = vmatpush1.bf16.msra.mxu0 0
    %326 = vmatprep.subr.bf16.mxu0 0
    %327 = vmatpush1.bf16.msra.mxu0 0
    %328 = vmatprep.subr.bf16.mxu0 0
    %329 = vmatpush1.bf16.msra.mxu0 0
    %330 = vmatprep.subr.bf16.mxu0 0
    %331 = vmatpush1.bf16.msra.mxu0 0
    %332 = vmatprep.subr.bf16.mxu0 0
    %333 = vmatpush1.bf16.msra.mxu0 0
    %334 = vmatprep.subr.bf16.mxu0 0
    %335 = vmatpush1.bf16.msra.mxu0 0
    %336 = vmatprep.subr.bf16.mxu0 0
    %337 = vmatpush1.bf16.msra.mxu0 0
    %338 = vmatprep.subr.bf16.mxu0 0
    %339 = vmatpush1.bf16.msra.mxu0 0
    %340 = vmatprep.mubr.bf16.mxu0 0
    %341 = vmatmul.mubr.bf16.gmra.mrb[0].mxu0 %v236
    %v342 = vpop.f32.mrb[0].mxu0
    %v343 = vadd.f32 %v258, %v342
    %v344 = vpop.f32.mrb[0].mxu0
    %v345 = vpop.f32.mrb[0].mxu0
    %v346 = vadd.f32 %v258, %v345
    %v347 = vpop.f32.mrb[0].mxu0
    %348 = vdwg.mxu0
    %v349 = vmax.f32 %v343, 0.0
    %v350 = vmax.f32 %v346, 0.0
    %351 = vadd.xlane.f32.xlu0 %v349
    %v352 = vpop.xlane.xlu0 %351
    %353 = vadd.xlane.f32.xlu0 %v350
    %v354 = vpop.xlane.xlu0 %353
    %v355 = vmul.f32 %v349, %v349
    %v356 = vmul.f32 %v350, %v350
    %357 = vadd.xlane.f32.xlu0 %v355
    %v358 = vpop.xlane.xlu0 %357
    %359 = vadd.xlane.f32.xlu0 %v356
    %v360 = vpop.xlane.xlu0 %359
    %v361 = vmul.f32 %v352, 0.03125
    %v362 = vmul.f32 %v354, 0.03125
    %v363 = vmul.f32 %v358, 0.03125
    %v364 = vmul.f32 %v360, 0.03125
    %v365 = vmul.f32 %v361, %v361
    %v366 = vmul.f32 %v362, %v362
    %v367 = vsub.f32 %v363, %v365
    %v368 = vsub.f32 %v364, %v366
    %v369 = vmax.f32 %v367, 0.0
    %v370 = vmax.f32 %v368, 0.0
    %v371 = vadd.f32 %v369, 1e-05
    %v372 = vadd.f32 %v370, 1e-05
    %v373 = vrsqrt.pop %v371
    %v374 = vrsqrt.pop %v372
    %v375 = vsub.f32 %v349, %v361
    %v376 = vsub.f32 %v350, %v362
    %v377 = vmul.f32 %v375, %v373
    %v378 = vmul.f32 %v376, %v374
    %v379 = vpack.c.bf16 %v378, %v377
    %s380 = scalar_lea.vmem [#allocation7], 64
    %v381 = vld [vmem:[%s380] sm:$0xf]
    %v382 = vld [vmem:[%s380 + $0x4] sm:$0xf]
    %v383 = vld [vmem:[%s380 + $0x8] sm:$0xf]
    %v384 = vld [vmem:[%s380 + $0xc] sm:$0xf]
    %v385 = vld [vmem:[%s380 + $0x10] sm:$0xf]
    %v386 = vld [vmem:[%s380 + $0x14] sm:$0xf]
    %v387 = vld [vmem:[%s380 + $0x18] sm:$0xf]
    %v388 = vld [vmem:[%s380 + $0x1c] sm:$0xf]
    %v389 = vld [vmem:[%s380 + $0x20] sm:$0xf]
    %v390 = vld [vmem:[%s380 + $0x24] sm:$0xf]
    %v391 = vld [vmem:[%s380 + $0x28] sm:$0xf]
    %v392 = vld [vmem:[%s380 + $0x2c] sm:$0xf]
    %v393 = vld [vmem:[%s380 + $0x30] sm:$0xf]
    %v394 = vld [vmem:[%s380 + $0x34] sm:$0xf]
    %v395 = vld [vmem:[%s380 + $0x38] sm:$0xf]
    %v396 = vld [vmem:[%s380 + $0x3c] sm:$0xf]
    %s397 = scalar_lea.vmem %s4, 1
    %v398 = vld [vmem:[%s397] sm:$0x1]
    %v400 = vlaneseq
    %v401 = vshrl.u32 %v400, 7
    %v402 = vsub.s32 0, %v401
    %v403 = vrot.slane %v398, %v402
    %v421 = vunpack.c.l.b16 %v381
    %v422 = vunpack.c.l.b16 %v382
    %v423 = vunpack.c.l.b16 %v383
    %v424 = vunpack.c.l.b16 %v384
    %v425 = vunpack.c.l.b16 %v385
    %v426 = vunpack.c.l.b16 %v386
    %v427 = vunpack.c.l.b16 %v387
    %v428 = vunpack.c.l.b16 %v388
    %v429 = vunpack.c.l.b16 %v389
    %v430 = vunpack.c.l.b16 %v390
    %v431 = vunpack.c.l.b16 %v391
    %v432 = vunpack.c.l.b16 %v392
    %v433 = vunpack.c.l.b16 %v393
    %v434 = vunpack.c.l.b16 %v394
    %v435 = vunpack.c.l.b16 %v395
    %v436 = vunpack.c.l.b16 %v396
    %v437 = vpack.c.b16 %v422, %v421
    %v438 = vpack.c.b16 %v424, %v423
    %v439 = vpack.c.b16 %v426, %v425
    %v440 = vpack.c.b16 %v428, %v427
    %v441 = vpack.c.b16 %v430, %v429
    %v442 = vpack.c.b16 %v432, %v431
    %v443 = vpack.c.b16 %v434, %v433
    %v444 = vpack.c.b16 %v436, %v435
    %453 = vmatprep.subr.bf16.mxu0 0
    %454 = vmatpush1.bf16.msra.mxu0 %v437
    %455 = vmatprep.subr.bf16.mxu0 0
    %456 = vmatpush1.bf16.msra.mxu0 %v438
    %457 = vmatprep.subr.bf16.mxu0 0
    %458 = vmatpush1.bf16.msra.mxu0 %v439
    %459 = vmatprep.subr.bf16.mxu0 0
    %460 = vmatpush1.bf16.msra.mxu0 %v440
    %461 = vmatprep.subr.bf16.mxu0 0
    %462 = vmatpush1.bf16.msra.mxu0 %v441
    %463 = vmatprep.subr.bf16.mxu0 0
    %464 = vmatpush1.bf16.msra.mxu0 %v442
    %465 = vmatprep.subr.bf16.mxu0 0
    %466 = vmatpush1.bf16.msra.mxu0 %v443
    %467 = vmatprep.subr.bf16.mxu0 0
    %468 = vmatpush1.bf16.msra.mxu0 %v444
    %469 = vmatprep.subr.bf16.mxu0 0
    %470 = vmatpush1.bf16.msra.mxu0 0
    %471 = vmatprep.subr.bf16.mxu0 0
    %472 = vmatpush1.bf16.msra.mxu0 0
    %473 = vmatprep.subr.bf16.mxu0 0
    %474 = vmatpush1.bf16.msra.mxu0 0
    %475 = vmatprep.subr.bf16.mxu0 0
    %476 = vmatpush1.bf16.msra.mxu0 0
    %477 = vmatprep.subr.bf16.mxu0 0
    %478 = vmatpush1.bf16.msra.mxu0 0
    %479 = vmatprep.subr.bf16.mxu0 0
    %480 = vmatpush1.bf16.msra.mxu0 0
    %481 = vmatprep.subr.bf16.mxu0 0
    %482 = vmatpush1.bf16.msra.mxu0 0
    %483 = vmatprep.subr.bf16.mxu0 0
    %484 = vmatpush1.bf16.msra.mxu0 0
    %485 = vmatprep.mubr.bf16.mxu0 0
    %486 = vmatmul.mubr.bf16.gmra.mrb[0].mxu0 %v379
    %v487 = vpop.f32.mrb[0].mxu0
    %v488 = vadd.f32 %v403, %v487
    %v489 = vpop.f32.mrb[0].mxu0
    %v490 = vpop.f32.mrb[0].mxu0
    %v491 = vadd.f32 %v403, %v490
    %v492 = vpop.f32.mrb[0].mxu0
    %493 = vdwg.mxu0
    %v494 = vmax.f32 %v488, 0.0
    %v495 = vmax.f32 %v491, 0.0
    %v496 = vpack.c.bf16 %v495, %v494
    %v497 = vld [vmem:[#allocation8] sm:$0xf]
    %v498 = vld [vmem:[#allocation8 + $0x4] sm:$0xf]
    %v499 = vld [vmem:[#allocation8 + $0x8] sm:$0xf]
    %v500 = vld [vmem:[#allocation8 + $0xc] sm:$0xf]
    %v501 = vld [vmem:[#allocation8 + $0x10] sm:$0xf]
    %v502 = vld [vmem:[#allocation8 + $0x14] sm:$0xf]
    %v503 = vld [vmem:[#allocation8 + $0x18] sm:$0xf]
    %v504 = vld [vmem:[#allocation8 + $0x1c] sm:$0xf]
    %v505 = vld [vmem:[#allocation8 + $0x20] sm:$0xf]
    %v506 = vld [vmem:[#allocation8 + $0x24] sm:$0xf]
    %v507 = vld [vmem:[#allocation8 + $0x28] sm:$0xf]
    %v508 = vld [vmem:[#allocation8 + $0x2c] sm:$0xf]
    %v509 = vld [vmem:[#allocation8 + $0x30] sm:$0xf]
    %v510 = vld [vmem:[#allocation8 + $0x34] sm:$0xf]
    %v511 = vld [vmem:[#allocation8 + $0x38] sm:$0xf]
    %v512 = vld [vmem:[#allocation8 + $0x3c] sm:$0xf]
    %v513 = vld [vmem:[%s6] sm:$0x1]
    %v515 = vlaneseq
    %v516 = vshrl.u32 %v515, 7
    %v517 = vsub.s32 0, %v516
    %v518 = vrot.slane %v513, %v517
    %v536 = vunpack.c.l.b16 %v497
    %v537 = vunpack.c.l.b16 %v498
    %v538 = vunpack.c.l.b16 %v499
    %v539 = vunpack.c.l.b16 %v500
    %v540 = vunpack.c.l.b16 %v501
    %v541 = vunpack.c.l.b16 %v502
    %v542 = vunpack.c.l.b16 %v503
    %v543 = vunpack.c.l.b16 %v504
    %v544 = vunpack.c.l.b16 %v505
    %v545 = vunpack.c.l.b16 %v506
    %v546 = vunpack.c.l.b16 %v507
    %v547 = vunpack.c.l.b16 %v508
    %v548 = vunpack.c.l.b16 %v509
    %v549 = vunpack.c.l.b16 %v510
    %v550 = vunpack.c.l.b16 %v511
    %v551 = vunpack.c.l.b16 %v512
    %v552 = vpack.c.b16 %v537, %v536
    %v553 = vpack.c.b16 %v539, %v538
    %v554 = vpack.c.b16 %v541, %v540
    %v555 = vpack.c.b16 %v543, %v542
    %v556 = vpack.c.b16 %v545, %v544
    %v557 = vpack.c.b16 %v547, %v546
    %v558 = vpack.c.b16 %v549, %v548
    %v559 = vpack.c.b16 %v551, %v550
    %568 = vmatprep.subr.bf16.mxu0 0
    %569 = vmatpush1.bf16.msra.mxu0 %v552
    %570 = vmatprep.subr.bf16.mxu0 0
    %571 = vmatpush1.bf16.msra.mxu0 %v553
    %572 = vmatprep.subr.bf16.mxu0 0
    %573 = vmatpush1.bf16.msra.mxu0 %v554
    %574 = vmatprep.subr.bf16.mxu0 0
    %575 = vmatpush1.bf16.msra.mxu0 %v555
    %576 = vmatprep.subr.bf16.mxu0 0
    %577 = vmatpush1.bf16.msra.mxu0 %v556
    %578 = vmatprep.subr.bf16.mxu0 0
    %579 = vmatpush1.bf16.msra.mxu0 %v557
    %580 = vmatprep.subr.bf16.mxu0 0
    %581 = vmatpush1.bf16.msra.mxu0 %v558
    %582 = vmatprep.subr.bf16.mxu0 0
    %583 = vmatpush1.bf16.msra.mxu0 %v559
    %584 = vmatprep.subr.bf16.mxu0 0
    %585 = vmatpush1.bf16.msra.mxu0 0
    %586 = vmatprep.subr.bf16.mxu0 0
    %587 = vmatpush1.bf16.msra.mxu0 0
    %588 = vmatprep.subr.bf16.mxu0 0
    %589 = vmatpush1.bf16.msra.mxu0 0
    %590 = vmatprep.subr.bf16.mxu0 0
    %591 = vmatpush1.bf16.msra.mxu0 0
    %592 = vmatprep.subr.bf16.mxu0 0
    %593 = vmatpush1.bf16.msra.mxu0 0
    %594 = vmatprep.subr.bf16.mxu0 0
    %595 = vmatpush1.bf16.msra.mxu0 0
    %596 = vmatprep.subr.bf16.mxu0 0
    %597 = vmatpush1.bf16.msra.mxu0 0
    %598 = vmatprep.subr.bf16.mxu0 0
    %599 = vmatpush1.bf16.msra.mxu0 0
    %600 = vmatprep.mubr.bf16.mxu0 0
    %601 = vmatmul.mubr.bf16.gmra.mrb[0].mxu0 %v496
    %v602 = vpop.f32.mrb[0].mxu0
    %v603 = vadd.f32 %v518, %v602
    %v604 = vpop.f32.mrb[0].mxu0
    %v605 = vpop.f32.mrb[0].mxu0
    %v606 = vadd.f32 %v518, %v605
    %v607 = vpop.f32.mrb[0].mxu0
    %608 = vdwg.mxu0
    %v609 = vld [vmem:[%s7] sm:$0x1]
    %v610 = vtanh.pop %v603
    %v611 = vtanh.pop %v606
    %v613 = vlaneseq
    %v614 = vshrl.u32 %v613, 7
    %v615 = vsub.s32 0, %v614
    %v616 = vrot.slane %v609, %v615
    %v618 = vmul.f32 %v616, %v610
    %v619 = vmul.f32 %v616, %v611
    %620 = vst [vmem:[#allocation10] sm:$0xff] %v618
    %621 = vst [vmem:[#allocation10 + $0x8] sm:$0xff] %v619
    // Predicated region
    $region50: #{tpu_custom_call.1} parent=1 // pred_check
      _
    $region51: #{tpu_custom_call.1} parent=1 // pred_check_branch
      %623 = sbr.rel (0) target = $region53
    $region52: #{tpu_custom_call.1} parent=1 // pred_region
      %s625 = ssub.s32 256, 256
      %626 = vsyncadd [#allocation4], %s625
      %s627 = sshll.u32 [#allocation10], 4
      %s628 = int_to_ptr.vmem [resolvable:$true] %s627
      %633 = dma.vmem_to_hbm [thread:$0]  %s628, 256, %s8, [#allocation4], 128, 128, 8
    $region53: #{tpu_custom_call.1} parent=1 // pred_fallthru
      _
    // Predicated region
    $region54: #{tpu_custom_call.1} parent=1 // pred_check
      _
    $region55: #{tpu_custom_call.1} parent=1 // pred_check_branch
      %635 = sbr.rel (0) target = $region57
    $region56: #{tpu_custom_call.1} parent=1 // pred_region
      %636 = dma.done [#allocation4], 256
    $region57: #{tpu_custom_call.1} parent=1 // pred_fallthru
      _
    %637 = vsyncpa [#allocation3], 1
    %638 = vsyncpa [#allocation6], 1
    %639 = vsyncpa [#allocation9], 1
    %640 = vsyncpa [#allocation4], 1

</llo_original>
